<compile_context>
chip_gen: v5e
topology: v5e:2x2
jax: 0.10.0
libtpu: 0.0.40
codegen_flags: <defaults>
</compile_context>

<pallas_src>
import jax
import jax.numpy as jnp
from jax import lax
from jax.experimental import pallas as pl
from jax.experimental.pallas import tpu as pltpu

_NEG = -1e30  # finite "-inf" for padded vocab columns (exp underflows to 0 in the lse)


def _round_up(x, m):
    return ((x + m - 1) // m) * m


# ---------------------------------------------------------------------------
# Masked-LM head kernel: logits tile + online logsumexp across vocab tiles.
# ---------------------------------------------------------------------------
def _mlm_head_kernel(x_ref, w_ref, b_ref, logits_ref, lse_ref, m_sc, l_sc):
    j = pl.program_id(1)

    @pl.when(j == 0)
    def _():
        m_sc[...] = jnp.full_like(m_sc, -jnp.inf)
        l_sc[...] = jnp.zeros_like(l_sc)

    # (r_tile, H) contracted with (v_tile, H) on H -> (r_tile, v_tile).
    # Weight stays in PyTorch (out, in) layout; the MXU handles the transpose.
    logits = lax.dot_general(
        x_ref[...], w_ref[...],
        dimension_numbers=(((1,), (1,)), ((), ())),
        preferred_element_type=jnp.float32)
    logits = logits + b_ref[...]                      # (1, v_tile) broadcasts

    # Online max / sum-exp accumulation across the vocab axis.
    m_prev = m_sc[...]
    m_new = jnp.maximum(m_prev, jnp.max(logits, axis=-1, keepdims=True))
    l_sc[...] = l_sc[...] * jnp.exp(m_prev - m_new) + jnp.sum(
        jnp.exp(logits - m_new), axis=-1, keepdims=True)
    m_sc[...] = m_new

    logits_ref[...] = logits.astype(logits_ref.dtype)

    @pl.when(j == pl.num_programs(1) - 1)
    def _():
        lse_ref[...] = m_sc[...] + jnp.log(l_sc[...])


# ---------------------------------------------------------------------------
# Wrappers
# ---------------------------------------------------------------------------
def masked_lm_head(x_hidden, w_mlm, b_mlm, *, row_tile=256, v_tile=2048,
                   compute_dtype=jnp.bfloat16, out_dtype=jnp.float32):
    """MaskedLanguageModel: log_softmax(Linear(hidden, vocab)(x)), per token.

    x_hidden: (B, S, H) float32
    w_mlm:    (V, H)   (PyTorch nn.Linear layout: (out, in)) -- never transposed in HBM
    b_mlm:    (V,)
    returns:  (B, S, V) log-probabilities in out_dtype
    """
    B, S, H = x_hidden.shape
    V = w_mlm.shape[0]
    rows = B * S

    # Tile sizes: MXU-sized row tiles, lane-dense (multiple-of-128) vocab tiles.
    r_tile = min(row_tile, _round_up(rows, 16))        # 16-granular for bf16 sublane packing
    rows_pad = _round_up(rows, r_tile)
    v_tile_eff = min(v_tile, _round_up(V, 128))
    v_pad = _round_up(V, v_tile_eff)

    # One-time casts / padding in the wrapper (not per grid step).
    x2d = x_hidden.reshape(rows, H).astype(compute_dtype)
    if rows_pad != rows:
        x2d = jnp.pad(x2d, ((0, rows_pad - rows), (0, 0)))
    w = w_mlm.astype(compute_dtype)
    b = b_mlm.astype(jnp.float32)
    if v_pad != V:
        w = jnp.pad(w, ((0, v_pad - V), (0, 0)))
        b = jnp.pad(b, (0, v_pad - V), constant_values=_NEG)
    b2d = b.reshape(1, v_pad)

    grid = (rows_pad // r_tile, v_pad // v_tile_eff)

    logits, lse = pl.pallas_call(
        _mlm_head_kernel,
        out_shape=(jax.ShapeDtypeStruct((rows_pad, v_pad), out_dtype),
                   jax.ShapeDtypeStruct((rows_pad, 1), jnp.float32)),
        grid_spec=pltpu.PrefetchScalarGridSpec(
            num_scalar_prefetch=0,
            grid=grid,
            in_specs=[
                pl.BlockSpec((r_tile, H), lambda i, j: (i, 0)),
                pl.BlockSpec((v_tile_eff, H), lambda i, j: (j, 0)),
                pl.BlockSpec((1, v_tile_eff), lambda i, j: (0, j)),
            ],
            out_specs=[
                pl.BlockSpec((r_tile, v_tile_eff), lambda i, j: (i, j)),
                pl.BlockSpec((r_tile, 1), lambda i, j: (i, 0)),
            ],
            scratch_shapes=[pltpu.VMEM((r_tile, 1), jnp.float32),   # running max
                            pltpu.VMEM((r_tile, 1), jnp.float32)],  # running sum-exp
        ),
        compiler_params=pltpu.CompilerParams(
            dimension_semantics=("parallel", "arbitrary"),
            vmem_limit_bytes=48 * 1024 * 1024),
    )(x2d, w, b2d)

    # Cheap epilogue: log_softmax = logits - lse.  For training, fuse this into the
    # downstream NLL loss / label gather instead so the (B, S, V) tensor is never re-read.
    log_probs = (logits[:rows, :V].astype(jnp.float32) - lse[:rows]).astype(out_dtype)
    return log_probs.reshape(B, S, V)


def next_sentence_head(x_hidden, w_nsp, b_nsp):
    """NextSentencePrediction: log_softmax(Linear(hidden, 2)(x[:, 0])).

    Kept in plain JAX per the perf review: a 2-wide output under-utilizes the MXU/lanes
    and pallas_call launch overhead would exceed the compute of this tiny GEMM.
    """
    logits = x_hidden[:, 0, :] @ w_nsp.T + b_nsp
    return jax.nn.log_softmax(logits, axis=-1)


def bertlm_forward(x_hidden, params):
    """BERTLM.forward over BERT hidden states -> (nsp_logprobs, mlm_logprobs)."""
    nsp = next_sentence_head(x_hidden, params["w_nsp"], params["b_nsp"])
    mlm = masked_lm_head(x_hidden, params["w_mlm"], params["b_mlm"])
    return nsp, mlm


# ---------------------------------------------------------------------------
# Reference (plain JAX) for verification -- mirrors the bf16 MXU compute path.
# ---------------------------------------------------------------------------
def bertlm_reference(x_hidden, params, compute_dtype=jnp.bfloat16):
    nsp_logits = x_hidden[:, 0, :] @ params["w_nsp"].T + params["b_nsp"]
    mlm_logits = lax.dot_general(
        x_hidden.astype(compute_dtype), params["w_mlm"].astype(compute_dtype),
        dimension_numbers=(((2,), (1,)), ((), ())),
        preferred_element_type=jnp.float32) + params["b_mlm"]
    return (jax.nn.log_softmax(nsp_logits, axis=-1),
            jax.nn.log_softmax(mlm_logits, axis=-1))


if __name__ == "__main__":
    # Small, deterministic shapes.
    B, S, H, V = 2, 8, 32, 512

    key = jax.random.PRNGKey(0)
    k_x, k_wm, k_bm, k_wn, k_bn = jax.random.split(key, 5)

    # BERT output hidden states (stand-in for self.bert(x, segment_label)).
    x_hidden = jax.random.normal(k_x, (B, S, H), dtype=jnp.float32)

    # PyTorch nn.Linear shapes: weight=(out, in), bias=(out,).
    params = {
        "w_mlm": 0.02 * jax.random.normal(k_wm, (V, H), dtype=jnp.float32),
        "b_mlm": 0.02 * jax.random.normal(k_bm, (V,), dtype=jnp.float32),
        "w_nsp": 0.02 * jax.random.normal(k_wn, (2, H), dtype=jnp.float32),
        "b_nsp": 0.02 * jax.random.normal(k_bn, (2,), dtype=jnp.float32),
    }

    nsp_out, mlm_out = jax.block_until_ready(bertlm_forward(x_hidden, params))
    nsp_ref, mlm_ref = bertlm_reference(x_hidden, params)

    assert nsp_out.shape == (B, 2)
    assert mlm_out.shape == (B, S, V)
    assert jnp.allclose(nsp_out, nsp_ref, atol=1e-5, rtol=1e-5)
    assert jnp.allclose(mlm_out, mlm_ref, atol=1e-3, rtol=1e-3)
    assert bool(jnp.all(jnp.isfinite(mlm_out)))

    print("KERNEL_OK")
</pallas_src>

<mosaic_0001>
module attributes {stable_mosaic.version = 11 : i64} {
  func.func @_mlm_head_kernel(%arg0: i32, %arg1: i32, %arg2: memref<16x32xbf16, #tpu.memory_space<vmem>>, %arg3: memref<512x32xbf16, #tpu.memory_space<vmem>>, %arg4: memref<1x512xf32, #tpu.memory_space<vmem>>, %arg5: memref<16x512xf32, #tpu.memory_space<vmem>>, %arg6: memref<16x1xf32, #tpu.memory_space<vmem>>, %arg7: memref<16x1xf32, #tpu.memory_space<vmem>>, %arg8: memref<16x1xf32, #tpu.memory_space<vmem>>) attributes {dimension_semantics = [#tpu.dimension_semantics<parallel>, #tpu.dimension_semantics<arbitrary>], iteration_bounds = array<i64: 1, 1>, scalar_prefetch = 0 : i64, scratch_operands = 2 : i64, tpu.core_type = #tpu.core_type<tc>, window_params = [{transform_indices = @transform_0, window_bounds = array<i64: 16, 32>}, {transform_indices = @transform_1, window_bounds = array<i64: 512, 32>}, {transform_indices = @transform_2, window_bounds = array<i64: 1, 512>}, {transform_indices = @transform_3, window_bounds = array<i64: 16, 512>}, {transform_indices = @transform_4, window_bounds = array<i64: 16, 1>}]} {
    %c0_i32 = arith.constant 0 : i32
    %0 = arith.cmpi eq, %arg1, %c0_i32 : i32
    %1 = arith.extui %0 : i1 to i32
    %c0_i32_0 = arith.constant 0 : i32
    %2 = arith.cmpi ne, %1, %c0_i32_0 : i32
    scf.if %2 {
      %cst_20 = arith.constant 0xFF800000 : f32
      %29 = vector.broadcast %cst_20 : f32 to vector<16x1xf32>
      %c0_21 = arith.constant 0 : index
      %c0_22 = arith.constant 0 : index
      %30 = vector.load %arg7[%c0_21, %c0_22] : memref<16x1xf32, #tpu.memory_space<vmem>>, vector<16x1xf32>
      tpu.vector_store %arg7[%c0_21, %c0_22], %29 {strides = array<i32>} : memref<16x1xf32, #tpu.memory_space<vmem>>, vector<16x1xf32>,
      %cst_23 = arith.constant 0.000000e+00 : f32
      %31 = vector.broadcast %cst_23 : f32 to vector<16x1xf32>
      %c0_24 = arith.constant 0 : index
      %c0_25 = arith.constant 0 : index
      %32 = vector.load %arg8[%c0_24, %c0_25] : memref<16x1xf32, #tpu.memory_space<vmem>>, vector<16x1xf32>
      tpu.vector_store %arg8[%c0_24, %c0_25], %31 {strides = array<i32>} : memref<16x1xf32, #tpu.memory_space<vmem>>, vector<16x1xf32>,
    } else {
    }
    %c0 = arith.constant 0 : index
    %c0_1 = arith.constant 0 : index
    %3 = vector.load %arg2[%c0, %c0_1] : memref<16x32xbf16, #tpu.memory_space<vmem>>, vector<16x32xbf16>
    %c0_2 = arith.constant 0 : index
    %c0_3 = arith.constant 0 : index
    %4 = vector.load %arg3[%c0_2, %c0_3] : memref<512x32xbf16, #tpu.memory_space<vmem>>, vector<512x32xbf16>
    %cst = arith.constant dense<0.000000e+00> : vector<16x512xf32>
    %5 = tpu.matmul %3, %4, %cst {dimension_numbers = #tpu.dot_dimension_numbers<[1], [1], [0], [0], [0, 0, 1, 0], [], []>} : vector<16x32xbf16>, vector<512x32xbf16>, vector<16x512xf32> -> vector<16x512xf32>
    %c0_4 = arith.constant 0 : index
    %c0_5 = arith.constant 0 : index
    %6 = vector.load %arg4[%c0_4, %c0_5] : memref<1x512xf32, #tpu.memory_space<vmem>>, vector<1x512xf32>
    %7 = vector.broadcast %6 : vector<1x512xf32> to vector<16x512xf32>
    %8 = arith.addf %5, %7 : vector<16x512xf32>
    %c0_6 = arith.constant 0 : index
    %c0_7 = arith.constant 0 : index
    %9 = vector.load %arg7[%c0_6, %c0_7] : memref<16x1xf32, #tpu.memory_space<vmem>>, vector<16x1xf32>
    %cst_8 = arith.constant dense<0xFF800000> : vector<16xf32>
    %10 = vector.multi_reduction <maximumf>, %8, %cst_8 [1] : vector<16x512xf32> to vector<16xf32>
    %11 = vector.shape_cast %10 : vector<16xf32> to vector<16x1xf32>
    %12 = arith.maximumf %9, %11 : vector<16x1xf32>
    %c0_9 = arith.constant 0 : index
    %c0_10 = arith.constant 0 : index
    %13 = vector.load %arg8[%c0_9, %c0_10] : memref<16x1xf32, #tpu.memory_space<vmem>>, vector<16x1xf32>
    %14 = arith.subf %9, %12 : vector<16x1xf32>
    %15 = math.exp %14 : vector<16x1xf32>
    %16 = arith.mulf %13, %15 : vector<16x1xf32>
    %17 = vector.broadcast %12 : vector<16x1xf32> to vector<16x512xf32>
    %18 = arith.subf %8, %17 : vector<16x512xf32>
    %19 = math.exp %18 : vector<16x512xf32>
    %cst_11 = arith.constant dense<0.000000e+00> : vector<16xf32>
    %20 = vector.multi_reduction <add>, %19, %cst_11 [1] : vector<16x512xf32> to vector<16xf32>
    %21 = vector.shape_cast %20 : vector<16xf32> to vector<16x1xf32>
    %22 = arith.addf %16, %21 : vector<16x1xf32>
    %c0_12 = arith.constant 0 : index
    %c0_13 = arith.constant 0 : index
    %23 = vector.load %arg8[%c0_12, %c0_13] : memref<16x1xf32, #tpu.memory_space<vmem>>, vector<16x1xf32>
    tpu.vector_store %arg8[%c0_12, %c0_13], %22 {strides = array<i32>} : memref<16x1xf32, #tpu.memory_space<vmem>>, vector<16x1xf32>,
    %c0_14 = arith.constant 0 : index
    %c0_15 = arith.constant 0 : index
    %24 = vector.load %arg7[%c0_14, %c0_15] : memref<16x1xf32, #tpu.memory_space<vmem>>, vector<16x1xf32>
    tpu.vector_store %arg7[%c0_14, %c0_15], %12 {strides = array<i32>} : memref<16x1xf32, #tpu.memory_space<vmem>>, vector<16x1xf32>,
    %c0_16 = arith.constant 0 : index
    %c0_17 = arith.constant 0 : index
    %25 = vector.load %arg5[%c0_16, %c0_17] : memref<16x512xf32, #tpu.memory_space<vmem>>, vector<16x512xf32>
    tpu.vector_store %arg5[%c0_16, %c0_17], %8 {strides = array<i32>} : memref<16x512xf32, #tpu.memory_space<vmem>>, vector<16x512xf32>,
    %c0_i32_18 = arith.constant 0 : i32
    %26 = arith.cmpi eq, %arg1, %c0_i32_18 : i32
    %27 = arith.extui %26 : i1 to i32
    %c0_i32_19 = arith.constant 0 : i32
    %28 = arith.cmpi ne, %27, %c0_i32_19 : i32
    scf.if %28 {
      %c0_20 = arith.constant 0 : index
      %c0_21 = arith.constant 0 : index
      %29 = vector.load %arg7[%c0_20, %c0_21] : memref<16x1xf32, #tpu.memory_space<vmem>>, vector<16x1xf32>
      %c0_22 = arith.constant 0 : index
      %c0_23 = arith.constant 0 : index
      %30 = vector.load %arg8[%c0_22, %c0_23] : memref<16x1xf32, #tpu.memory_space<vmem>>, vector<16x1xf32>
      %31 = math.log %30 : vector<16x1xf32>
      %32 = arith.addf %29, %31 : vector<16x1xf32>
      %c0_24 = arith.constant 0 : index
      %c0_25 = arith.constant 0 : index
      %33 = vector.load %arg6[%c0_24, %c0_25] : memref<16x1xf32, #tpu.memory_space<vmem>>, vector<16x1xf32>
      tpu.vector_store %arg6[%c0_24, %c0_25], %32 {strides = array<i32>} : memref<16x1xf32, #tpu.memory_space<vmem>>, vector<16x1xf32>,
    } else {
    }
    return
  }
  func.func @transform_0(%arg0: i32, %arg1: i32) -> (i32, i32) {
    %c0_i32 = arith.constant 0 : i32
    %c0_i32_0 = arith.constant 0 : i32
    return %arg0, %c0_i32 : i32, i32
  }
  func.func @transform_1(%arg0: i32, %arg1: i32) -> (i32, i32) {
    %c0_i32 = arith.constant 0 : i32
    %c0_i32_0 = arith.constant 0 : i32
    return %arg1, %c0_i32 : i32, i32
  }
  func.func @transform_2(%arg0: i32, %arg1: i32) -> (i32, i32) {
    %c0_i32 = arith.constant 0 : i32
    %c0_i32_0 = arith.constant 0 : i32
    return %c0_i32, %arg1 : i32, i32
  }
  func.func @transform_3(%arg0: i32, %arg1: i32) -> (i32, i32) {
    %c0_i32 = arith.constant 0 : i32
    return %arg0, %arg1 : i32, i32
  }
  func.func @transform_4(%arg0: i32, %arg1: i32) -> (i32, i32) {
    %c0_i32 = arith.constant 0 : i32
    %c0_i32_0 = arith.constant 0 : i32
    return %arg0, %c0_i32 : i32, i32
  }
}

</mosaic_0001>

<llo_original>
// kernel: tpu_custom_call.1
$region0: #{tpu_custom_call.1}
  #allocation0 [shape = 'u32[]', space=smem, size = 0x4, offset = 0x4, fixed_abs, tag = 'smem constant byte address 0x4 - core index']
  #allocation1 [shape = 'u32[72,128]{1,0:T(1,128)}', space=vmem, size = 0x9000, scoped, tag = 'internal scratch']
  #allocation2 [shape = 'f32[16,1]{1,0:T(8,128)}', space=vmem, size = 0x2000, scoped, tag = 'scratch operand']
  #allocation3 [shape = 'f32[16,1]{1,0:T(8,128)}', space=vmem, size = 0x2000, scoped, tag = 'scratch operand']
  %s0 = inlined_call_operand.vmem [shape: bf16[16,32], index: 0, kind: input, shape index: {}]
  %s1 = inlined_call_operand.vmem [shape: bf16[512,32], index: 1, kind: input, shape index: {}]
  %s2 = inlined_call_operand.vmem [shape: f32[1,512], index: 2, kind: input, shape index: {}]
  %s3 = inlined_call_operand.hbm [shape: f32[16,512], index: 3, kind: output, shape index: {0}]
  %s4 = inlined_call_operand.vmem [shape: f32[16,1], index: 4, kind: output, shape index: {1}]
  %5 = xla_tuple %s3, %s4
  %s6 = sld [smem:[#allocation0]]
  $region38: #{tpu_custom_call.1} parent=0
    _
  %s8 = ssub.s32 1, %s6
  %s9 = scalar_select 0, %s8, %s6
  $region1: #{tpu_custom_call.1} parent=0
    #allocation4 [shape = 'u8[32768]{0}', space=vmem, size = 0x8000, scoped, tag = 'output window, operand 0, single buffered']
    #allocation5 [shape = 's32[1]{0}', space=sflag, size = 0x4, scoped, tag = 'scoped memory for tpu_custom_call.1']
    %10 = vsyncpa [#allocation5], 0
    // Predicated region
    $region2: #{tpu_custom_call.1} parent=1 // pred_check
      _
    $region3: #{tpu_custom_call.1} parent=1 // pred_check_branch
      %12 = sbr.rel (0) target = $region5
    $region4: #{tpu_custom_call.1} parent=1 // pred_region
      _
    $region5: #{tpu_custom_call.1} parent=1 // pred_fallthru
      _
    // Predicated region
    $region6: #{tpu_custom_call.1} parent=1 // pred_check
      _
    $region7: #{tpu_custom_call.1} parent=1 // pred_check_branch
      %14 = sbr.rel (0) target = $region9
    $region8: #{tpu_custom_call.1} parent=1 // pred_region
      _
    $region9: #{tpu_custom_call.1} parent=1 // pred_fallthru
      _
    // Predicated region
    $region10: #{tpu_custom_call.1} parent=1 // pred_check
      _
    $region11: #{tpu_custom_call.1} parent=1 // pred_check_branch
      %16 = sbr.rel (0) target = $region13
    $region12: #{tpu_custom_call.1} parent=1 // pred_region
      _
    $region13: #{tpu_custom_call.1} parent=1 // pred_fallthru
      _
    %p17 = scmp.eq.s32.totalorder 0, 0
    // Predicated region
    $region14: #{tpu_custom_call.1} parent=1 // pred_check
      %p18 = pneg %p17
    $region15: #{tpu_custom_call.1} parent=1 // pred_check_branch
      %20 = sbr.rel (%p18) target = $region17
    $region16: #{tpu_custom_call.1} parent=1 // pred_region
      %vm21 = vcmask 7168
      %22 = vst.msk [vmem:[#allocation2] sm:$0xff] %vm21, -inf
      %23 = vst.msk [vmem:[#allocation2 + $0x8] sm:$0xff] %vm21, -inf
      %24 = vst.msk [vmem:[#allocation3] sm:$0xff] %vm21, 0.0
      %25 = vst.msk [vmem:[#allocation3 + $0x8] sm:$0xff] %vm21, 0.0
    $region17: #{tpu_custom_call.1} parent=1 // pred_fallthru
      _
    %v26 = vld [vmem:[%s0] sm:$0xf]
    %v27 = vld [vmem:[%s0 + $0x4] sm:$0xf]
    %v28 = vld [vmem:[%s1] sm:$0xf]
    %v29 = vld [vmem:[%s1 + $0x4] sm:$0xf]
    %v30 = vld [vmem:[%s1 + $0x8] sm:$0xf]
    %v31 = vld [vmem:[%s1 + $0xc] sm:$0xf]
    %v32 = vld [vmem:[%s1 + $0x10] sm:$0xf]
    %v33 = vld [vmem:[%s1 + $0x14] sm:$0xf]
    %v34 = vld [vmem:[%s1 + $0x18] sm:$0xf]
    %v35 = vld [vmem:[%s1 + $0x1c] sm:$0xf]
    %v36 = vld [vmem:[%s1 + $0x20] sm:$0xf]
    %v37 = vld [vmem:[%s1 + $0x24] sm:$0xf]
    %v38 = vld [vmem:[%s1 + $0x28] sm:$0xf]
    %v39 = vld [vmem:[%s1 + $0x2c] sm:$0xf]
    %v40 = vld [vmem:[%s1 + $0x30] sm:$0xf]
    %v41 = vld [vmem:[%s1 + $0x34] sm:$0xf]
    %v42 = vld [vmem:[%s1 + $0x38] sm:$0xf]
    %v43 = vld [vmem:[%s1 + $0x3c] sm:$0xf]
    %v44 = vld [vmem:[%s1 + $0x40] sm:$0xf]
    %v45 = vld [vmem:[%s1 + $0x44] sm:$0xf]
    %v46 = vld [vmem:[%s1 + $0x48] sm:$0xf]
    %v47 = vld [vmem:[%s1 + $0x4c] sm:$0xf]
    %v48 = vld [vmem:[%s1 + $0x50] sm:$0xf]
    %v49 = vld [vmem:[%s1 + $0x54] sm:$0xf]
    %v50 = vld [vmem:[%s1 + $0x58] sm:$0xf]
    %v51 = vld [vmem:[%s1 + $0x5c] sm:$0xf]
    %v52 = vld [vmem:[%s1 + $0x60] sm:$0xf]
    %v53 = vld [vmem:[%s1 + $0x64] sm:$0xf]
    %v54 = vld [vmem:[%s1 + $0x68] sm:$0xf]
    %v55 = vld [vmem:[%s1 + $0x6c] sm:$0xf]
    %v56 = vld [vmem:[%s1 + $0x70] sm:$0xf]
    %v57 = vld [vmem:[%s1 + $0x74] sm:$0xf]
    %v58 = vld [vmem:[%s1 + $0x78] sm:$0xf]
    %v59 = vld [vmem:[%s1 + $0x7c] sm:$0xf]
    %v60 = vld [vmem:[%s1 + $0x80] sm:$0xf]
    %v61 = vld [vmem:[%s1 + $0x84] sm:$0xf]
    %v62 = vld [vmem:[%s1 + $0x88] sm:$0xf]
    %v63 = vld [vmem:[%s1 + $0x8c] sm:$0xf]
    %v64 = vld [vmem:[%s1 + $0x90] sm:$0xf]
    %v65 = vld [vmem:[%s1 + $0x94] sm:$0xf]
    %v66 = vld [vmem:[%s1 + $0x98] sm:$0xf]
    %v67 = vld [vmem:[%s1 + $0x9c] sm:$0xf]
    %v68 = vld [vmem:[%s1 + $0xa0] sm:$0xf]
    %v69 = vld [vmem:[%s1 + $0xa4] sm:$0xf]
    %v70 = vld [vmem:[%s1 + $0xa8] sm:$0xf]
    %v71 = vld [vmem:[%s1 + $0xac] sm:$0xf]
    %v72 = vld [vmem:[%s1 + $0xb0] sm:$0xf]
    %v73 = vld [vmem:[%s1 + $0xb4] sm:$0xf]
    %v74 = vld [vmem:[%s1 + $0xb8] sm:$0xf]
    %v75 = vld [vmem:[%s1 + $0xbc] sm:$0xf]
    %v76 = vld [vmem:[%s1 + $0xc0] sm:$0xf]
    %v77 = vld [vmem:[%s1 + $0xc4] sm:$0xf]
    %v78 = vld [vmem:[%s1 + $0xc8] sm:$0xf]
    %v79 = vld [vmem:[%s1 + $0xcc] sm:$0xf]
    %v80 = vld [vmem:[%s1 + $0xd0] sm:$0xf]
    %v81 = vld [vmem:[%s1 + $0xd4] sm:$0xf]
    %v82 = vld [vmem:[%s1 + $0xd8] sm:$0xf]
    %v83 = vld [vmem:[%s1 + $0xdc] sm:$0xf]
    %v84 = vld [vmem:[%s1 + $0xe0] sm:$0xf]
    %v85 = vld [vmem:[%s1 + $0xe4] sm:$0xf]
    %v86 = vld [vmem:[%s1 + $0xe8] sm:$0xf]
    %v87 = vld [vmem:[%s1 + $0xec] sm:$0xf]
    %v88 = vld [vmem:[%s1 + $0xf0] sm:$0xf]
    %v89 = vld [vmem:[%s1 + $0xf4] sm:$0xf]
    %v90 = vld [vmem:[%s1 + $0xf8] sm:$0xf]
    %v91 = vld [vmem:[%s1 + $0xfc] sm:$0xf]
    %v92 = vld [vmem:[%s2] sm:$0xf]
    %v94 = vperm.slane %v92, 0
    %v95 = vperm.slane %v92, 1
    %v96 = vperm.slane %v92, 2
    %v97 = vperm.slane %v92, 3
    %v104 = vunpack.c.l.b16 %v26
    %v105 = vunpack.c.l.b16 %v27
    %v106 = vpack.c.b16 %v105, %v104
    %v171 = vunpack.c.l.b16 %v28
    %v172 = vunpack.c.l.b16 %v29
    %v173 = vunpack.c.l.b16 %v30
    %v174 = vunpack.c.l.b16 %v31
    %v175 = vunpack.c.l.b16 %v32
    %v176 = vunpack.c.l.b16 %v33
    %v177 = vunpack.c.l.b16 %v34
    %v178 = vunpack.c.l.b16 %v35
    %v179 = vunpack.c.l.b16 %v36
    %v180 = vunpack.c.l.b16 %v37
    %v181 = vunpack.c.l.b16 %v38
    %v182 = vunpack.c.l.b16 %v39
    %v183 = vunpack.c.l.b16 %v40
    %v184 = vunpack.c.l.b16 %v41
    %v185 = vunpack.c.l.b16 %v42
    %v186 = vunpack.c.l.b16 %v43
    %v187 = vunpack.c.l.b16 %v44
    %v188 = vunpack.c.l.b16 %v45
    %v189 = vunpack.c.l.b16 %v46
    %v190 = vunpack.c.l.b16 %v47
    %v191 = vunpack.c.l.b16 %v48
    %v192 = vunpack.c.l.b16 %v49
    %v193 = vunpack.c.l.b16 %v50
    %v194 = vunpack.c.l.b16 %v51
    %v195 = vunpack.c.l.b16 %v52
    %v196 = vunpack.c.l.b16 %v53
    %v197 = vunpack.c.l.b16 %v54
    %v198 = vunpack.c.l.b16 %v55
    %v199 = vunpack.c.l.b16 %v56
    %v200 = vunpack.c.l.b16 %v57
    %v201 = vunpack.c.l.b16 %v58
    %v202 = vunpack.c.l.b16 %v59
    %v203 = vunpack.c.l.b16 %v60
    %v204 = vunpack.c.l.b16 %v61
    %v205 = vunpack.c.l.b16 %v62
    %v206 = vunpack.c.l.b16 %v63
    %v207 = vunpack.c.l.b16 %v64
    %v208 = vunpack.c.l.b16 %v65
    %v209 = vunpack.c.l.b16 %v66
    %v210 = vunpack.c.l.b16 %v67
    %v211 = vunpack.c.l.b16 %v68
    %v212 = vunpack.c.l.b16 %v69
    %v213 = vunpack.c.l.b16 %v70
    %v214 = vunpack.c.l.b16 %v71
    %v215 = vunpack.c.l.b16 %v72
    %v216 = vunpack.c.l.b16 %v73
    %v217 = vunpack.c.l.b16 %v74
    %v218 = vunpack.c.l.b16 %v75
    %v219 = vunpack.c.l.b16 %v76
    %v220 = vunpack.c.l.b16 %v77
    %v221 = vunpack.c.l.b16 %v78
    %v222 = vunpack.c.l.b16 %v79
    %v223 = vunpack.c.l.b16 %v80
    %v224 = vunpack.c.l.b16 %v81
    %v225 = vunpack.c.l.b16 %v82
    %v226 = vunpack.c.l.b16 %v83
    %v227 = vunpack.c.l.b16 %v84
    %v228 = vunpack.c.l.b16 %v85
    %v229 = vunpack.c.l.b16 %v86
    %v230 = vunpack.c.l.b16 %v87
    %v231 = vunpack.c.l.b16 %v88
    %v232 = vunpack.c.l.b16 %v89
    %v233 = vunpack.c.l.b16 %v90
    %v234 = vunpack.c.l.b16 %v91
    %v235 = vpack.c.b16 %v172, %v171
    %v236 = vpack.c.b16 %v174, %v173
    %v237 = vpack.c.b16 %v176, %v175
    %v238 = vpack.c.b16 %v178, %v177
    %v239 = vpack.c.b16 %v180, %v179
    %v240 = vpack.c.b16 %v182, %v181
    %v241 = vpack.c.b16 %v184, %v183
    %v242 = vpack.c.b16 %v186, %v185
    %v243 = vpack.c.b16 %v188, %v187
    %v244 = vpack.c.b16 %v190, %v189
    %v245 = vpack.c.b16 %v192, %v191
    %v246 = vpack.c.b16 %v194, %v193
    %v247 = vpack.c.b16 %v196, %v195
    %v248 = vpack.c.b16 %v198, %v197
    %v249 = vpack.c.b16 %v200, %v199
    %v250 = vpack.c.b16 %v202, %v201
    %v251 = vpack.c.b16 %v204, %v203
    %v252 = vpack.c.b16 %v206, %v205
    %v253 = vpack.c.b16 %v208, %v207
    %v254 = vpack.c.b16 %v210, %v209
    %v255 = vpack.c.b16 %v212, %v211
    %v256 = vpack.c.b16 %v214, %v213
    %v257 = vpack.c.b16 %v216, %v215
    %v258 = vpack.c.b16 %v218, %v217
    %v259 = vpack.c.b16 %v220, %v219
    %v260 = vpack.c.b16 %v222, %v221
    %v261 = vpack.c.b16 %v224, %v223
    %v262 = vpack.c.b16 %v226, %v225
    %v263 = vpack.c.b16 %v228, %v227
    %v264 = vpack.c.b16 %v230, %v229
    %v265 = vpack.c.b16 %v232, %v231
    %v266 = vpack.c.b16 %v234, %v233
    %vm267 = vcmask 261120
    %v269 = vsel %vm267, %v106, 0
    %v272 = vsel %vm267, %v235, 0
    %v275 = vsel %vm267, %v236, 0
    %v278 = vsel %vm267, %v237, 0
    %v281 = vsel %vm267, %v238, 0
    %v284 = vsel %vm267, %v239, 0
    %v287 = vsel %vm267, %v240, 0
    %v290 = vsel %vm267, %v241, 0
    %v293 = vsel %vm267, %v242, 0
    %v296 = vsel %vm267, %v243, 0
    %v299 = vsel %vm267, %v244, 0
    %v302 = vsel %vm267, %v245, 0
    %v305 = vsel %vm267, %v246, 0
    %v308 = vsel %vm267, %v247, 0
    %v311 = vsel %vm267, %v248, 0
    %v314 = vsel %vm267, %v249, 0
    %v317 = vsel %vm267, %v250, 0
    %v320 = vsel %vm267, %v251, 0
    %v323 = vsel %vm267, %v252, 0
    %v326 = vsel %vm267, %v253, 0
    %v329 = vsel %vm267, %v254, 0
    %v332 = vsel %vm267, %v255, 0
    %v335 = vsel %vm267, %v256, 0
    %v338 = vsel %vm267, %v257, 0
    %v341 = vsel %vm267, %v258, 0
    %v344 = vsel %vm267, %v259, 0
    %v347 = vsel %vm267, %v260, 0
    %v350 = vsel %vm267, %v261, 0
    %v353 = vsel %vm267, %v262, 0
    %v356 = vsel %vm267, %v263, 0
    %v359 = vsel %vm267, %v264, 0
    %v362 = vsel %vm267, %v265, 0
    %v365 = vsel %vm267, %v266, 0
    %367 = vmatpush.bf16.xpose.msra.mxu0 %v293
    %368 = vmatpush.bf16.xpose.msra.mxu0 %v290
    %369 = vmatpush.bf16.xpose.msra.mxu0 %v287
    %370 = vmatpush.bf16.xpose.msra.mxu0 %v284
    %371 = vmatpush.bf16.xpose.msra.mxu0 %v281
    %372 = vmatpush.bf16.xpose.msra.mxu0 %v278
    %373 = vmatpush.bf16.xpose.msra.mxu0 %v275
    %374 = vmatpush.bf16.xpose.msra.mxu0 %v272
    %375 = vmatmul.bf16.gmra.mxu0 %v269
    %v376 = vpop.f32.mrf.mxu0
    %v377 = vadd.f32 %v94, %v376
    %v378 = vpop.f32.mrf.mxu0
    %v379 = vadd.f32 %v94, %v378
    %380 = vdwg.mxu0
    %381 = vmatpush.bf16.xpose.msra.mxu0 %v317
    %382 = vmatpush.bf16.xpose.msra.mxu0 %v314
    %383 = vmatpush.bf16.xpose.msra.mxu0 %v311
    %384 = vmatpush.bf16.xpose.msra.mxu0 %v308
    %385 = vmatpush.bf16.xpose.msra.mxu0 %v305
    %386 = vmatpush.bf16.xpose.msra.mxu0 %v302
    %387 = vmatpush.bf16.xpose.msra.mxu0 %v299
    %388 = vmatpush.bf16.xpose.msra.mxu0 %v296
    %389 = vmatmul.bf16.gmra.mxu0 %v269
    %v390 = vpop.f32.mrf.mxu0
    %v391 = vadd.f32 %v95, %v390
    %v392 = vpop.f32.mrf.mxu0
    %v393 = vadd.f32 %v95, %v392
    %394 = vdwg.mxu0
    %395 = vmatpush.bf16.xpose.msra.mxu0 %v341
    %396 = vmatpush.bf16.xpose.msra.mxu0 %v338
    %397 = vmatpush.bf16.xpose.msra.mxu0 %v335
    %398 = vmatpush.bf16.xpose.msra.mxu0 %v332
    %399 = vmatpush.bf16.xpose.msra.mxu0 %v329
    %400 = vmatpush.bf16.xpose.msra.mxu0 %v326
    %401 = vmatpush.bf16.xpose.msra.mxu0 %v323
    %402 = vmatpush.bf16.xpose.msra.mxu0 %v320
    %403 = vmatmul.bf16.gmra.mxu0 %v269
    %v404 = vpop.f32.mrf.mxu0
    %v405 = vadd.f32 %v96, %v404
    %v406 = vpop.f32.mrf.mxu0
    %v407 = vadd.f32 %v96, %v406
    %408 = vdwg.mxu0
    %409 = vmatpush.bf16.xpose.msra.mxu0 %v365
    %410 = vmatpush.bf16.xpose.msra.mxu0 %v362
    %411 = vmatpush.bf16.xpose.msra.mxu0 %v359
    %412 = vmatpush.bf16.xpose.msra.mxu0 %v356
    %413 = vmatpush.bf16.xpose.msra.mxu0 %v353
    %414 = vmatpush.bf16.xpose.msra.mxu0 %v350
    %415 = vmatpush.bf16.xpose.msra.mxu0 %v347
    %416 = vmatpush.bf16.xpose.msra.mxu0 %v344
    %417 = vmatmul.bf16.gmra.mxu0 %v269
    %v418 = vpop.f32.mrf.mxu0
    %v419 = vadd.f32 %v97, %v418
    %v420 = vpop.f32.mrf.mxu0
    %v421 = vadd.f32 %v97, %v420
    %422 = vdwg.mxu0
    %v423 = vld [vmem:[#allocation2] sm:$0xff]
    %v424 = vld [vmem:[#allocation2 + $0x8] sm:$0xff]
    %v425 = vmax.f32 %v377, %v405
    %v426 = vmax.f32 %v391, %v419
    %v427 = vmax.f32 %v425, %v426
    %428 = vmax.xlane.f32.xlu0 %v427
    %v429 = vpop.xlane.xlu0 %428
    %v430 = vmax.f32 %v379, %v407
    %v431 = vmax.f32 %v393, %v421
    %v432 = vmax.f32 %v430, %v431
    %433 = vmax.xlane.f32.xlu0 %v432
    %v434 = vpop.xlane.xlu0 %433
    %v435 = vmax.f32 %v423, %v429
    %v436 = vmax.f32 %v424, %v434
    %v437 = vld [vmem:[#allocation3] sm:$0xff]
    %v438 = vld [vmem:[#allocation3 + $0x8] sm:$0xff]
    %v439 = vsub.f32 %v423, %v435
    %v440 = vsub.f32 %v424, %v436
    %v441 = vmul.f32 %v439, 1.442695
    %v442 = vpow.pop %v441
    %v443 = vmul.f32 %v440, 1.442695
    %v444 = vpow.pop %v443
    %v445 = vmul.f32 %v437, %v442
    %v446 = vmul.f32 %v438, %v444
    %448 = vset.pattern.permute.xlu0 0
    %449 = vperm.xlu0 %448, %v435
    %v450 = vpop.permute.xlu0 %449
    %453 = vset.pattern.permute.xlu0 0
    %454 = vperm.xlu0 %453, %v436
    %v455 = vpop.permute.xlu0 %454
    %v457 = vsub.f32 %v377, %v450
    %v458 = vsub.f32 %v391, %v450
    %v459 = vsub.f32 %v405, %v450
    %v460 = vsub.f32 %v419, %v450
    %v461 = vsub.f32 %v379, %v455
    %v462 = vsub.f32 %v393, %v455
    %v463 = vsub.f32 %v407, %v455
    %v464 = vsub.f32 %v421, %v455
    %v465 = vmul.f32 %v457, 1.442695
    %v466 = vpow.pop %v465
    %v467 = vmul.f32 %v458, 1.442695
    %v468 = vpow.pop %v467
    %v469 = vmul.f32 %v459, 1.442695
    %v470 = vpow.pop %v469
    %v471 = vmul.f32 %v460, 1.442695
    %v472 = vpow.pop %v471
    %v473 = vmul.f32 %v461, 1.442695
    %v474 = vpow.pop %v473
    %v475 = vmul.f32 %v462, 1.442695
    %v476 = vpow.pop %v475
    %v477 = vmul.f32 %v463, 1.442695
    %v478 = vpow.pop %v477
    %v479 = vmul.f32 %v464, 1.442695
    %v480 = vpow.pop %v479
    %v481 = vadd.f32 %v466, %v468
    %v482 = vadd.f32 %v481, %v470
    %v483 = vadd.f32 %v482, %v472
    %484 = vadd.xlane.f32.xlu0 %v483
    %v485 = vpop.xlane.xlu0 %484
    %v486 = vadd.f32 %v474, %v476
    %v487 = vadd.f32 %v486, %v478
    %v488 = vadd.f32 %v487, %v480
    %489 = vadd.xlane.f32.xlu0 %v488
    %v490 = vpop.xlane.xlu0 %489
    %v491 = vadd.f32 %v445, %v485
    %v492 = vadd.f32 %v446, %v490
    %vm493 = vcmask 7168
    %494 = vst.msk [vmem:[#allocation3] sm:$0xff] %vm493, %v491
    %495 = vst.msk [vmem:[#allocation3 + $0x8] sm:$0xff] %vm493, %v492
    %496 = vst.msk [vmem:[#allocation2] sm:$0xff] %vm493, %v435
    %497 = vst.msk [vmem:[#allocation2 + $0x8] sm:$0xff] %vm493, %v436
    %498 = vst [vmem:[#allocation4] sm:$0xff] %v377
    %499 = vst [vmem:[#allocation4 + $0x8] sm:$0xff] %v391
    %500 = vst [vmem:[#allocation4 + $0x10] sm:$0xff] %v405
    %501 = vst [vmem:[#allocation4 + $0x18] sm:$0xff] %v419
    %502 = vst [vmem:[#allocation4 + $0x20] sm:$0xff] %v379
    %503 = vst [vmem:[#allocation4 + $0x28] sm:$0xff] %v393
    %504 = vst [vmem:[#allocation4 + $0x30] sm:$0xff] %v407
    %505 = vst [vmem:[#allocation4 + $0x38] sm:$0xff] %v421
    // Predicated region
    $region18: #{tpu_custom_call.1} parent=1 // pred_check
      %p506 = pneg %p17
    $region19: #{tpu_custom_call.1} parent=1 // pred_check_branch
      %508 = sbr.rel (%p506) target = $region21
    $region20: #{tpu_custom_call.1} parent=1 // pred_region
      %v509 = vld [vmem:[#allocation2] sm:$0xff]
      %v510 = vld [vmem:[#allocation2 + $0x8] sm:$0xff]
      %v511 = vld [vmem:[#allocation3] sm:$0xff]
      %v512 = vld [vmem:[#allocation3 + $0x8] sm:$0xff]
      %v513 = vlog2.pop %v511
      %v514 = vmul.f32 %v513, 0.6931472
      %v515 = vlog2.pop %v512
      %v516 = vmul.f32 %v515, 0.6931472
      %v517 = vadd.f32 %v509, %v514
      %v518 = vadd.f32 %v510, %v516
      %519 = vst.msk [vmem:[%s4] sm:$0xff] %vm493, %v517
      %520 = vst.msk [vmem:[%s4 + $0x8] sm:$0xff] %vm493, %v518
    $region21: #{tpu_custom_call.1} parent=1 // pred_fallthru
      _
    // Predicated region
    $region22: #{tpu_custom_call.1} parent=1 // pred_check
      _
    $region23: #{tpu_custom_call.1} parent=1 // pred_check_branch
      %522 = sbr.rel (0) target = $region25
    $region24: #{tpu_custom_call.1} parent=1 // pred_region
      %524 = vsyncadd [#allocation5], 0
      %s525 = sshll.u32 [#allocation4], 4
      %s526 = int_to_ptr.vmem [resolvable:$true] %s525
      %s527 = sshll.u32 %s3, 4
      %s528 = int_to_ptr.hbm [resolvable:$true] %s527
      %533 = dma.vmem_to_hbm [thread:$0]  %s526, 1024, %s528, [#allocation5], 512, 512, 32
    $region25: #{tpu_custom_call.1} parent=1 // pred_fallthru
      _
    // Predicated region
    $region26: #{tpu_custom_call.1} parent=1 // pred_check
      _
    $region27: #{tpu_custom_call.1} parent=1 // pred_check_branch
      %535 = sbr.rel (0) target = $region29
    $region28: #{tpu_custom_call.1} parent=1 // pred_region
      _
    $region29: #{tpu_custom_call.1} parent=1 // pred_fallthru
      _
    // Predicated region
    $region30: #{tpu_custom_call.1} parent=1 // pred_check
      _
    $region31: #{tpu_custom_call.1} parent=1 // pred_check_branch
      %537 = sbr.rel (0) target = $region33
    $region32: #{tpu_custom_call.1} parent=1 // pred_region
      %539 = dma.done [#allocation5], 1024
    $region33: #{tpu_custom_call.1} parent=1 // pred_fallthru
      _
    // Predicated region
    $region34: #{tpu_custom_call.1} parent=1 // pred_check
      _
    $region35: #{tpu_custom_call.1} parent=1 // pred_check_branch
      %541 = sbr.rel (0) target = $region37
    $region36: #{tpu_custom_call.1} parent=1 // pred_region
      _
    $region37: #{tpu_custom_call.1} parent=1 // pred_fallthru
      _
    %542 = vsyncpa [#allocation5], 1

</llo_original>
